<compile_context>
chip_gen: v5e
topology: v5e:2x2
jax: 0.10.0
libtpu: 0.0.40
codegen_flags: <defaults>
</compile_context>

<pallas_src>
import jax
import jax.numpy as jnp
from jax.experimental import pallas as pl
from jax.experimental.pallas import tpu as pltpu


def _round_up(n: int, m: int) -> int:
    return ((n + m - 1) // m) * m


# ----------------------------- kernel bodies -------------------------------

def _fused_linear_kernel(x_ref, w_ref, b_ref, o_ref):
    # Single matmul: x @ W_fused (bf16 operands, f32 MXU accumulation),
    # bias add in f32, one cast on the way out.
    acc = jnp.dot(x_ref[...], w_ref[...], preferred_element_type=jnp.float32)
    o_ref[...] = (acc + b_ref[...]).astype(o_ref.dtype)


def _two_layer_kernel(x_ref, w1_ref, b1_ref, w2_ref, b2_ref, o_ref):
    # Layer 1: x @ W1t + b1 (f32 accumulation / bias add).
    h = jnp.dot(x_ref[...], w1_ref[...], preferred_element_type=jnp.float32)
    h = (h + b1_ref[...]).astype(w2_ref.dtype)   # recast for the 2nd MXU pass
    # Layer 2.
    out = jnp.dot(h, w2_ref[...], preferred_element_type=jnp.float32)
    o_ref[...] = (out + b2_ref[...]).astype(o_ref.dtype)


# ----------------------------- param prep (once) ---------------------------

def prepare_params(w1, b1, w2, b2, *, compute_dtype=jnp.bfloat16,
                   fuse=True, lane_pad=True):
    """Run ONCE at init / param-load time (never in the per-call path).

    w1: [out, in], b1: [out], w2: [out, out], b2: [out] (torch.nn.Linear layout)

    Returns kernel-ready arrays:
      fused=True  -> (W [in, out_p], b [1, out_p])
      fuse=False  -> (W1t [in, hid], b1 [1, hid], W2t [hid, out_p], b2 [1, out_p])
    Weights pre-transposed and cast to `compute_dtype`; biases f32 rows.  The
    final output dim is zero-padded to a multiple of 128 when lane_pad=True
    (exact: the padding columns are zero and sliced off in the wrapper).
    """
    w1 = jnp.asarray(w1, jnp.float32)
    b1 = jnp.asarray(b1, jnp.float32)
    w2 = jnp.asarray(w2, jnp.float32)
    b2 = jnp.asarray(b2, jnp.float32)
    out_size = w2.shape[0]
    pad_o = (_round_up(out_size, 128) - out_size) if lane_pad else 0

    if fuse:
        # Exact algebra -- there is no nonlinearity between the two Linears.
        w = jnp.matmul(w2, w1, precision="highest").T          # [in, out]
        b = jnp.matmul(w2, b1[:, None], precision="highest")[:, 0] + b2
        if pad_o:
            w = jnp.pad(w, ((0, 0), (0, pad_o)))
            b = jnp.pad(b, (0, pad_o))
        return (w.astype(compute_dtype), b.reshape(1, -1))

    w1t = w1.T                                                  # [in, hid]
    w2t = w2.T                                                  # [hid, out]
    if pad_o:
        w2t = jnp.pad(w2t, ((0, 0), (0, pad_o)))
        b2 = jnp.pad(b2, (0, pad_o))
    return (w1t.astype(compute_dtype), b1.reshape(1, -1),
            w2t.astype(compute_dtype), b2.reshape(1, -1))


# ----------------------------- forward wrapper -----------------------------

def _two_layer_forward(x, params, *, out_features=None, block_m=256):
    """x: [B, input_size]; params: output of prepare_params().

    out_features: logical output width to slice back out (use when lane_pad
    padded the final dim); None -> return the padded width as-is.
    """
    B, in_size = x.shape
    compute_dtype = params[0].dtype
    out_p = params[-1].shape[-1]

    # Batch tile: biggest (8-aligned) tile up to block_m, or the full batch.
    tm = min(block_m, B)
    if tm != B:
        tm = max(8, (tm // 8) * 8)
    grid = (pl.cdiv(B, tm),)

    x_c = x.astype(compute_dtype)

    x_spec = pl.BlockSpec((tm, in_size), lambda i: (i, 0))
    out_spec = pl.BlockSpec((tm, out_p), lambda i: (i, 0))

    def resident(arr):
        # Constant index_map -> block stays VMEM-resident across the grid.
        return pl.BlockSpec(arr.shape, lambda i: (0, 0))

    cparams = pltpu.CompilerParams(dimension_semantics=("parallel",))

    if len(params) == 2:                      # fused single-matmul path
        w, b = params
        out = pl.pallas_call(
            _fused_linear_kernel,
            out_shape=jax.ShapeDtypeStruct((B, out_p), x.dtype),
            grid=grid,
            in_specs=[x_spec, resident(w), resident(b)],
            out_specs=out_spec,
            compiler_params=cparams,
        )(x_c, w, b)
    else:                                     # unfused two-matmul path
        w1t, b1r, w2t, b2r = params
        out = pl.pallas_call(
            _two_layer_kernel,
            out_shape=jax.ShapeDtypeStruct((B, out_p), x.dtype),
            grid=grid,
            in_specs=[x_spec, resident(w1t), resident(b1r),
                      resident(w2t), resident(b2r)],
            out_specs=out_spec,
            compiler_params=cparams,
        )(x_c, w1t, b1r, w2t, b2r)

    if out_features is not None and out_features != out_p:
        out = out[:, :out_features]
    return out


two_layer_forward = jax.jit(_two_layer_forward,
                            static_argnames=("out_features", "block_m"))


# ----------------------------- init & demo ---------------------------------

def init_params(key, input_size, output_size, dtype=jnp.float32):
    """torch.nn.Linear-style init: uniform(-1/sqrt(fan_in), 1/sqrt(fan_in))."""
    k1, k2, k3, k4 = jax.random.split(key, 4)
    bound1 = 1.0 / (input_size ** 0.5)
    bound2 = 1.0 / (output_size ** 0.5)
    w1 = jax.random.uniform(k1, (output_size, input_size), dtype, -bound1, bound1)
    b1 = jax.random.uniform(k2, (output_size,), dtype, -bound1, bound1)
    w2 = jax.random.uniform(k3, (output_size, output_size), dtype, -bound2, bound2)
    b2 = jax.random.uniform(k4, (output_size,), dtype, -bound2, bound2)
    return w1, b1, w2, b2


if __name__ == "__main__":
    batch = 8
    input_size = 32
    output_size = 32

    key = jax.random.PRNGKey(0)
    k_x, k_p = jax.random.split(key)
    x = jax.random.normal(k_x, (batch, input_size), jnp.float32)
    w1, b1, w2, b2 = init_params(k_p, input_size, output_size)

    # Pure-JAX f32 reference (exact torch module semantics).
    ref = jnp.matmul(jnp.matmul(x, w1.T, precision="highest") + b1,
                     w2.T, precision="highest") + b2

    # Default: fused single-matmul, bf16 operands, lane-padded (128) output.
    p_fused = prepare_params(w1, b1, w2, b2)
    out_fused = jax.block_until_ready(
        two_layer_forward(x, p_fused, out_features=output_size))

    # Unfused two-matmul path (kept for future nonlinearity insertion).
    p_unfused = prepare_params(w1, b1, w2, b2, fuse=False)
    out_unfused = jax.block_until_ready(
        two_layer_forward(x, p_unfused, out_features=output_size))

    # f32 / no-padding variant exercising the un-padded BlockSpec path.
    p_f32 = prepare_params(w1, b1, w2, b2, compute_dtype=jnp.float32,
                           fuse=False, lane_pad=False)
    out_f32 = jax.block_until_ready(two_layer_forward(x, p_f32))

    assert out_fused.shape == (batch, output_size)
    assert out_unfused.shape == (batch, output_size)
    assert out_f32.shape == (batch, output_size)
    # bf16 operands with f32 accumulation -> loose-ish tolerance vs f32 ref.
    assert jnp.allclose(out_fused, ref, atol=5e-2, rtol=5e-2)
    assert jnp.allclose(out_unfused, ref, atol=5e-2, rtol=5e-2)
    assert jnp.allclose(out_f32, ref, atol=5e-2, rtol=5e-2)

    print("KERNEL_OK")
</pallas_src>

<mosaic_0001>
module attributes {stable_mosaic.version = 11 : i64} {
  func.func @_fused_linear_kernel(%arg0: i32, %arg1: memref<8x32xbf16, #tpu.memory_space<vmem>>, %arg2: memref<32x128xbf16, #tpu.memory_space<vmem>>, %arg3: memref<1x128xf32, #tpu.memory_space<vmem>>, %arg4: memref<8x128xf32, #tpu.memory_space<vmem>>) attributes {dimension_semantics = [#tpu.dimension_semantics<parallel>], iteration_bounds = array<i64: 1>, scalar_prefetch = 0 : i64, scratch_operands = 0 : i64, tpu.core_type = #tpu.core_type<tc>, window_params = [{transform_indices = @transform_0, window_bounds = array<i64: 8, 32>}, {pipeline_mode = #tpu.pipeline_mode<synchronous>, transform_indices = @transform_1, window_bounds = array<i64: 32, 128>}, {pipeline_mode = #tpu.pipeline_mode<synchronous>, transform_indices = @transform_2, window_bounds = array<i64: 1, 128>}, {transform_indices = @transform_3, window_bounds = array<i64: 8, 128>}]} {
    %c0 = arith.constant 0 : index
    %c0_0 = arith.constant 0 : index
    %0 = vector.load %arg1[%c0, %c0_0] : memref<8x32xbf16, #tpu.memory_space<vmem>>, vector<8x32xbf16>
    %c0_1 = arith.constant 0 : index
    %c0_2 = arith.constant 0 : index
    %1 = vector.load %arg2[%c0_1, %c0_2] : memref<32x128xbf16, #tpu.memory_space<vmem>>, vector<32x128xbf16>
    %cst = arith.constant dense<0.000000e+00> : vector<8x128xf32>
    %2 = tpu.matmul %0, %1, %cst {dimension_numbers = #tpu.dot_dimension_numbers<[1], [0], [0], [1], [0, 0, 1, 1], [], []>} : vector<8x32xbf16>, vector<32x128xbf16>, vector<8x128xf32> -> vector<8x128xf32>
    %c0_3 = arith.constant 0 : index
    %c0_4 = arith.constant 0 : index
    %3 = vector.load %arg3[%c0_3, %c0_4] : memref<1x128xf32, #tpu.memory_space<vmem>>, vector<1x128xf32>
    %4 = vector.broadcast %3 : vector<1x128xf32> to vector<8x128xf32>
    %5 = arith.addf %2, %4 : vector<8x128xf32>
    %c0_5 = arith.constant 0 : index
    %c0_6 = arith.constant 0 : index
    %6 = vector.load %arg4[%c0_5, %c0_6] : memref<8x128xf32, #tpu.memory_space<vmem>>, vector<8x128xf32>
    tpu.vector_store %arg4[%c0_5, %c0_6], %5 {strides = array<i32>} : memref<8x128xf32, #tpu.memory_space<vmem>>, vector<8x128xf32>,
    return
  }
  func.func @transform_0(%arg0: i32) -> (i32, i32) {
    %c0_i32 = arith.constant 0 : i32
    %c0_i32_0 = arith.constant 0 : i32
    return %arg0, %c0_i32 : i32, i32
  }
  func.func @transform_1(%arg0: i32) -> (i32, i32) {
    %c0_i32 = arith.constant 0 : i32
    %c0_i32_0 = arith.constant 0 : i32
    %c0_i32_1 = arith.constant 0 : i32
    return %c0_i32, %c0_i32_0 : i32, i32
  }
  func.func @transform_2(%arg0: i32) -> (i32, i32) {
    %c0_i32 = arith.constant 0 : i32
    %c0_i32_0 = arith.constant 0 : i32
    %c0_i32_1 = arith.constant 0 : i32
    return %c0_i32, %c0_i32_0 : i32, i32
  }
  func.func @transform_3(%arg0: i32) -> (i32, i32) {
    %c0_i32 = arith.constant 0 : i32
    %c0_i32_0 = arith.constant 0 : i32
    return %arg0, %c0_i32 : i32, i32
  }
}

</mosaic_0001>

<llo_original>
// kernel: _two_layer_forward.1
$region0: #{_two_layer_forward.1}
  #allocation0 [shape = 'u32[]', space=smem, size = 0x4, offset = 0x4, fixed_abs, tag = 'smem constant byte address 0x4 - core index']
  #allocation1 [shape = 'u32[72,128]{1,0:T(1,128)}', space=vmem, size = 0x9000, scoped, tag = 'internal scratch']
  %s0 = inlined_call_operand.vmem [shape: bf16[8,32], index: 0, kind: input, shape index: {}]
  %s1 = inlined_call_operand.hbm [shape: bf16[32,128], index: 1, kind: input, shape index: {}]
  %s2 = inlined_call_operand.vmem [shape: f32[1,128], index: 2, kind: input, shape index: {}]
  %s3 = inlined_call_operand.hbm [shape: f32[8,128], index: 3, kind: output, shape index: {}]
  %s4 = sld [smem:[#allocation0]]
  $region26: #{_two_layer_forward.1} parent=0
    _
  %s6 = ssub.s32 1, %s4
  %s7 = scalar_select 0, %s6, %s4
  $region1: #{_two_layer_forward.1} parent=0
    #allocation2 [shape = 'u8[8192]{0}', space=vmem, size = 0x2000, scoped, tag = 'input window, operand 1, single buffered']
    #allocation3 [shape = 's32[1]{0}', space=sflag, size = 0x4, scoped, tag = 'scoped memory for _two_layer_forward.1']
    #allocation4 [shape = 's32[1]{0}', space=sflag, size = 0x4, scoped, tag = 'scoped memory for _two_layer_forward.1']
    #allocation5 [shape = 'u8[4096]{0}', space=vmem, size = 0x1000, scoped, tag = 'output window, operand 0, single buffered']
    %8 = vsyncpa [#allocation3], 0
    %9 = vsyncpa [#allocation4], 0
    // Predicated region
    $region2: #{_two_layer_forward.1} parent=1 // pred_check
      _
    $region3: #{_two_layer_forward.1} parent=1 // pred_check_branch
      %11 = sbr.rel (0) target = $region5
    $region4: #{_two_layer_forward.1} parent=1 // pred_region
      _
    $region5: #{_two_layer_forward.1} parent=1 // pred_fallthru
      _
    // Predicated region
    $region6: #{_two_layer_forward.1} parent=1 // pred_check
      _
    $region7: #{_two_layer_forward.1} parent=1 // pred_check_branch
      %13 = sbr.rel (0) target = $region9
    $region8: #{_two_layer_forward.1} parent=1 // pred_region
      %15 = vsyncadd [#allocation3], 0
      %s16 = sshll.u32 %s1, 4
      %s17 = int_to_ptr.hbm [resolvable:$true] %s16
      %s18 = sshll.u32 [#allocation2], 4
      %s19 = int_to_ptr.vmem [resolvable:$true] %s18
      %24 = dma.hbm_to_vmem [thread:$0]  %s17, 256, %s19, [#allocation3], 64, 64, 4
    $region9: #{_two_layer_forward.1} parent=1 // pred_fallthru
      _
    // Predicated region
    $region10: #{_two_layer_forward.1} parent=1 // pred_check
      _
    $region11: #{_two_layer_forward.1} parent=1 // pred_check_branch
      %26 = sbr.rel (0) target = $region13
    $region12: #{_two_layer_forward.1} parent=1 // pred_region
      _
    $region13: #{_two_layer_forward.1} parent=1 // pred_fallthru
      _
    // Predicated region
    $region14: #{_two_layer_forward.1} parent=1 // pred_check
      _
    $region15: #{_two_layer_forward.1} parent=1 // pred_check_branch
      %28 = sbr.rel (0) target = $region17
    $region16: #{_two_layer_forward.1} parent=1 // pred_region
      %30 = dma.done [#allocation3], 256
    $region17: #{_two_layer_forward.1} parent=1 // pred_fallthru
      _
    %v32 = vld [vmem:[%s0] sm:$0xf]
    %v33 = vld [vmem:[#allocation2] sm:$0xf]
    %v34 = vld [vmem:[#allocation2 + $0x4] sm:$0xf]
    %v35 = vld [vmem:[#allocation2 + $0x8] sm:$0xf]
    %v36 = vld [vmem:[#allocation2 + $0xc] sm:$0xf]
    %v37 = vld [vmem:[%s2] sm:$0x1]
    %v39 = vperm.slane %v37, 0
    %v45 = vunpack.c.l.b16 %v33
    %v46 = vunpack.c.l.b16 %v34
    %v47 = vunpack.c.l.b16 %v35
    %v48 = vunpack.c.l.b16 %v36
    %v49 = vpack.c.b16 %v46, %v45
    %v50 = vpack.c.b16 %v48, %v47
    %vm53 = vcmask 261120
    %v55 = vsel %vm53, %v32, 0
    %57 = vmatpush.bf16.msra.mxu0 0
    %58 = vmatpush.bf16.msra.mxu0 0
    %59 = vmatpush.bf16.msra.mxu0 0
    %60 = vmatpush.bf16.msra.mxu0 0
    %61 = vmatpush.bf16.msra.mxu0 0
    %62 = vmatpush.bf16.msra.mxu0 0
    %63 = vmatpush.bf16.msra.mxu0 %v50
    %64 = vmatpush.bf16.msra.mxu0 %v49
    %65 = vmatmul.bf16.gmra.mxu0 %v55
    %v66 = vpop.f32.mrf.mxu0
    %v67 = vadd.f32 %v39, %v66
    %v68 = vpop.f32.mrf.mxu0
    %69 = vdwg.mxu0
    %70 = vst [vmem:[#allocation5] sm:$0xff] %v67
    // Predicated region
    $region18: #{_two_layer_forward.1} parent=1 // pred_check
      _
    $region19: #{_two_layer_forward.1} parent=1 // pred_check_branch
      %72 = sbr.rel (0) target = $region21
    $region20: #{_two_layer_forward.1} parent=1 // pred_region
      %74 = vsyncadd [#allocation4], 0
      %s76 = sshll.u32 [#allocation5], 4
      %s77 = int_to_ptr.vmem [resolvable:$true] %s76
      %s78 = sshll.u32 %s3, 4
      %s79 = int_to_ptr.hbm [resolvable:$true] %s78
      %81 = dma.vmem_to_hbm [thread:$0]  %s77, 128, %s79, [#allocation4]
    $region21: #{_two_layer_forward.1} parent=1 // pred_fallthru
      _
    // Predicated region
    $region22: #{_two_layer_forward.1} parent=1 // pred_check
      _
    $region23: #{_two_layer_forward.1} parent=1 // pred_check_branch
      %83 = sbr.rel (0) target = $region25
    $region24: #{_two_layer_forward.1} parent=1 // pred_region
      %85 = dma.done [#allocation4], 128
    $region25: #{_two_layer_forward.1} parent=1 // pred_fallthru
      _
    %86 = vsyncpa [#allocation3], 1
    %87 = vsyncpa [#allocation4], 1

</llo_original>
